<compile_context>
chip_gen: v7x
topology: tpu7x:2x2x1
jax: 0.10.0
libtpu: 0.0.40
codegen_flags: <defaults>
</compile_context>

<pallas_src>
import functools

import jax
import jax.numpy as jnp
from jax.experimental import pallas as pl
from jax.experimental.pallas import tpu as pltpu

LATENT_DIM = 256


# --------------------------------------------------------------------------
# Generation-aware VMEM / megacore policy
#   v5e/v6e: 128 MiB VMEM, 1 TensorCore; v7x: 64 MiB VMEM, 2 TensorCores.
# --------------------------------------------------------------------------
def _tpu_vmem_capacity():
    try:
        v = getattr(pltpu.get_tpu_info(), "vmem_capacity_bytes", None)
        if v:
            return int(v)
    except Exception:
        pass
    return 64 * 1024 * 1024  # conservative (v7x-sized) fallback


def _is_multi_tc_chip():
    try:
        kind = jax.devices()[0].device_kind.lower()
    except Exception:
        return False
    return ("v7" in kind) or ("v4" in kind)  # chips whose grid spans 2 TCs


_VMEM_PHYS = _tpu_vmem_capacity()
_VMEM_LIMIT = min(_VMEM_PHYS * 3 // 4, 96 * 1024 * 1024)   # requested scoped limit
_VMEM_BUDGET = min(_VMEM_PHYS // 2, 48 * 1024 * 1024)      # per-kernel working set
_MULTI_TC = _is_multi_tc_chip()


# --------------------------------------------------------------------------
# Matmul kernels:  y = act((x @ w) * scale + bias)
#   x: bf16, w: bf16 or int8 (dequantized in-register), f32 accumulation.
# --------------------------------------------------------------------------
def _apply_act(y, activation):
    if activation == "relu":
        return jnp.maximum(y, 0.0)
    if activation == "sigmoid":
        return 1.0 / (1.0 + jnp.exp(-y))
    return y


def _to_bf16(v):
    # int8 -> f32 -> bf16: plain VPU converts, hidden under the weight DMA.
    if v.dtype == jnp.int8:
        return v.astype(jnp.float32).astype(jnp.bfloat16)
    return v.astype(jnp.bfloat16)


def _mm_kernel_single_k(x_ref, w_ref, s_ref, b_ref, o_ref, *, activation):
    """K fits in one tile: no accumulator scratch, single-pass epilogue."""
    acc = jnp.dot(x_ref[...], _to_bf16(w_ref[...]),
                  preferred_element_type=jnp.float32)
    y = _apply_act(acc * s_ref[...] + b_ref[...], activation)
    o_ref[...] = y.astype(o_ref.dtype)


def _mm_kernel_multi_k(x_ref, w_ref, s_ref, b_ref, o_ref, acc_ref, *, activation):
    k = pl.program_id(2)

    @pl.when(k == 0)
    def _():
        acc_ref[...] = jnp.zeros_like(acc_ref)

    acc_ref[...] += jnp.dot(x_ref[...], _to_bf16(w_ref[...]),
                            preferred_element_type=jnp.float32)

    @pl.when(k == pl.num_programs(2) - 1)
    def _():
        y = _apply_act(acc_ref[...] * s_ref[...] + b_ref[...], activation)
        o_ref[...] = y.astype(o_ref.dtype)


def _choose_tiles(M, K, N, x_bytes, w_bytes, out_bytes):
    """Pick (tm, tk, tn) under the generation-aware VMEM budget."""

    def fits(tm, tk, tn):
        b = 2 * (tm * tk * x_bytes + tk * tn * w_bytes + tn * 8)  # x, w, scale+bias
        b += 2 * tm * tn * out_bytes                              # output tile
        if K > tk:                                                # multi-k keeps acc
            b += tm * tn * 4
        return b <= _VMEM_BUDGET

    tk = min(K, 8192)
    while K % tk:
        tk //= 2
    tn = min(N, 8192)
    while N % tn:
        tn //= 2
    # tiny-M FC layers: split N only when a second TensorCore can take it.
    if _MULTI_TC and M <= 8 and tn == N and N >= 256:
        tn //= 2
    tm = min(M, 8192)
    while M % tm:
        tm //= 2
    while not fits(tm, tk, tn) and tm % 2 == 0 and tm > 256:
        tm //= 2
    while not fits(tm, tk, tn) and tn % 2 == 0 and tn > 128:
        tn //= 2
    while not fits(tm, tk, tn) and tk % 2 == 0 and tk > 512:
        tk //= 2
    return tm, tk, tn


def matmul_bias_act(x, w, b, activation="none", out_dtype=jnp.float32,
                    w_scale=None):
    """y = act((x @ w) * w_scale + b).

    x: [M, K] (cast to bf16); w: [K, N] bf16 or int8, N a multiple of 128;
    b: [N] f32; w_scale: [N] f32 per-column dequant scale (None -> ones).
    Returns [M, N] in out_dtype.
    """
    M, K = x.shape
    K2, N = w.shape
    assert K == K2 and N % 128 == 0, (x.shape, w.shape)
    if w_scale is None:
        w_scale = jnp.ones((N,), jnp.float32)
    x = x.astype(jnp.bfloat16)
    if w.dtype != jnp.int8:
        w = w.astype(jnp.bfloat16)

    w_bytes = jnp.dtype(w.dtype).itemsize
    out_bytes = jnp.dtype(out_dtype).itemsize
    tm, tk, tn = _choose_tiles(M, K, N, 2, w_bytes, out_bytes)
    assert M % tm == 0 and K % tk == 0 and N % tn == 0, (M, K, N, tm, tk, tn)

    s2 = w_scale.reshape(1, N).astype(jnp.float32)
    b2 = b.reshape(1, N).astype(jnp.float32)
    single_k = (K == tk)

    if single_k:
        grid = (M // tm, N // tn)
        in_specs = [
            pl.BlockSpec((tm, tk), lambda i, j: (i, 0)),
            pl.BlockSpec((tk, tn), lambda i, j: (0, j)),
            pl.BlockSpec((1, tn), lambda i, j: (0, j)),
            pl.BlockSpec((1, tn), lambda i, j: (0, j)),
        ]
        out_spec = pl.BlockSpec((tm, tn), lambda i, j: (i, j))
        scratch = []
        kernel = functools.partial(_mm_kernel_single_k, activation=activation)
        sem = ("parallel", "parallel")
    else:
        grid = (M // tm, N // tn, K // tk)
        in_specs = [
            pl.BlockSpec((tm, tk), lambda i, j, k: (i, k)),
            pl.BlockSpec((tk, tn), lambda i, j, k: (k, j)),
            pl.BlockSpec((1, tn), lambda i, j, k: (0, j)),
            pl.BlockSpec((1, tn), lambda i, j, k: (0, j)),
        ]
        out_spec = pl.BlockSpec((tm, tn), lambda i, j, k: (i, j))
        scratch = [pltpu.VMEM((tm, tn), jnp.float32)]
        kernel = functools.partial(_mm_kernel_multi_k, activation=activation)
        sem = ("parallel", "parallel", "arbitrary")

    return pl.pallas_call(
        kernel,
        out_shape=jax.ShapeDtypeStruct((M, N), out_dtype),
        grid_spec=pltpu.PrefetchScalarGridSpec(
            num_scalar_prefetch=0, grid=grid,
            in_specs=in_specs, out_specs=out_spec, scratch_shapes=scratch),
        compiler_params=pltpu.CompilerParams(
            dimension_semantics=sem, vmem_limit_bytes=_VMEM_LIMIT),
    )(x, w, s2, b2)


# --------------------------------------------------------------------------
# Fused [mu | log_var] head + reparameterization (one pallas_call)
# --------------------------------------------------------------------------
def _mulv_reparam_kernel(h_ref, w_ref, b_ref, eps_ref, mu_ref, lv_ref, z_ref):
    acc = jnp.dot(h_ref[...], w_ref[...],
                  preferred_element_type=jnp.float32) + b_ref[...]
    mu = acc[:, :LATENT_DIM]
    lv = acc[:, LATENT_DIM:]
    mu_ref[...] = mu
    lv_ref[...] = lv
    z_ref[...] = mu + eps_ref[...] * jnp.exp(0.5 * lv)


def mulv_reparameterize(h, w, b, eps):
    """h:[B,1024] -> (mu, log_var, z), all f32, no HBM round-trip in between."""
    B = h.shape[0]
    sd = jax.ShapeDtypeStruct((B, LATENT_DIM), jnp.float32)
    return pl.pallas_call(
        _mulv_reparam_kernel,
        out_shape=(sd, sd, sd),
        compiler_params=pltpu.CompilerParams(vmem_limit_bytes=_VMEM_LIMIT),
    )(h.astype(jnp.bfloat16), w.astype(jnp.bfloat16),
      b.reshape(1, -1).astype(jnp.float32), eps.astype(jnp.float32))


# --------------------------------------------------------------------------
# Conv / ConvTranspose wrappers (patch extraction / overlap-add is XLA glue;
# all matmul-shaped compute runs in the Pallas kernels above)
# --------------------------------------------------------------------------
def conv2d_s2k4p1(x, wmat, b_pad, cout, activation):
    """Conv2d(kernel=4, stride=2, padding=1).  x NHWC, wmat [16*Cin, Npad]."""
    B, H, W, C = x.shape
    Ho, Wo = H // 2, W // 2
    # TODO(synk): in-kernel im2col gather (manual DMA) to avoid HBM patch tensor.
    xp = jnp.pad(x.astype(jnp.bfloat16), ((0, 0), (1, 1), (1, 1), (0, 0)))
    cols = []
    for dy in range(4):
        for dx in range(4):
            cols.append(xp[:, dy:dy + 2 * Ho - 1:2, dx:dx + 2 * Wo - 1:2, :])
    patches = jnp.stack(cols, axis=3).reshape(B * Ho * Wo, 16 * C)
    y = matmul_bias_act(patches, wmat, b_pad, activation, out_dtype=jnp.bfloat16)
    return y[:, :cout].reshape(B, Ho, Wo, cout)


def conv_transpose2d_s2k4p1(x, wmat, b, activation, out_dtype=jnp.bfloat16):
    """ConvTranspose2d(kernel=4, stride=2, padding=1).  x NHWC,
    wmat [Cin, pad(16*Cout)] in (ky, kx, co) column order, b [Cout] f32.
    One lane-dense matmul, then overlap-add (torch formula
    out[2*iy+ky-1, 2*ix+kx-1] += x*w), then bias + activation in f32."""
    B, H, W, Cin = x.shape
    cout = b.shape[0]
    npad = wmat.shape[1]
    y = matmul_bias_act(x.reshape(B * H * W, Cin), wmat,
                        jnp.zeros((npad,), jnp.float32), "none",
                        out_dtype=jnp.bfloat16)
    y = y[:, :16 * cout].reshape(B, H, W, 4, 4, cout)
    # TODO(synk): lane-dense fused Pallas epilogue instead of this XLA glue.
    acc = None
    for m in (0, 1):
        for n in (0, 1):
            slab = y[:, :, :, 2 * m:2 * m + 2, 2 * n:2 * n + 2, :].astype(jnp.float32)
            part = jnp.pad(slab, ((0, 0), (m, 1 - m), (n, 1 - n),
                                  (0, 0), (0, 0), (0, 0)))
            acc = part if acc is None else acc + part
    out = jnp.transpose(acc, (0, 1, 3, 2, 4, 5))          # [B, H+1, 2, W+1, 2, C]
    out = out.reshape(B, 2 * (H + 1), 2 * (W + 1), cout)[:, 1:1 + 2 * H, 1:1 + 2 * W, :]
    out = out + b.reshape(1, 1, 1, cout)
    if activation == "relu":
        out = jnp.maximum(out, 0.0)
    elif activation == "sigmoid":
        out = jax.nn.sigmoid(out)
    return out.astype(out_dtype)


# --------------------------------------------------------------------------
# Parameter init (torch layouts, f32) and one-time kernel-layout preparation
# --------------------------------------------------------------------------
def _pad_axis(a, axis, mult):
    n = a.shape[axis]
    pad = (-n) % mult
    if pad == 0:
        return a
    widths = [(0, 0)] * a.ndim
    widths[axis] = (0, pad)
    return jnp.pad(a, widths)


def _conv_wmat(w):
    """torch Conv2d weight [Cout, Cin, 4, 4] -> [16*Cin, pad128(Cout)] bf16."""
    cout, cin = w.shape[0], w.shape[1]
    wmat = jnp.transpose(w.astype(jnp.float32), (2, 3, 1, 0)).reshape(16 * cin, cout)
    return _pad_axis(wmat, 1, 128).astype(jnp.bfloat16)


def _deconv_wmat(w):
    """torch ConvTranspose2d weight [Cin, Cout, 4, 4] -> [Cin, pad128(16*Cout)]."""
    cin, cout = w.shape[0], w.shape[1]
    wmat = jnp.transpose(w.astype(jnp.float32), (0, 2, 3, 1)).reshape(cin, 16 * cout)
    return _pad_axis(wmat, 1, 128).astype(jnp.bfloat16)


def _quantize_int8(w):
    """Symmetric per-output-column int8; dequant scale goes in the epilogue."""
    s = jnp.max(jnp.abs(w), axis=0) / 127.0
    s = jnp.where(s > 0, s, 1.0)
    q = jnp.clip(jnp.round(w / s), -127.0, 127.0).astype(jnp.int8)
    return q, s.astype(jnp.float32)


def init_params(key):
    """Deterministic PyTorch-style uniform(-1/sqrt(fan_in), +) init, torch layouts."""
    ks = jax.random.split(key, 26)

    def u(k, shape, fan_in):
        s = 1.0 / float(fan_in) ** 0.5
        return jax.random.uniform(k, shape, jnp.float32, -s, s)

    p, i = {}, 0
    for n, (cin, cout) in enumerate([(3, 16), (16, 32), (32, 64), (64, 128)], 1):
        p[f"enc_w{n}"] = u(ks[i], (cout, cin, 4, 4), cin * 16); i += 1
        p[f"enc_b{n}"] = u(ks[i], (cout,), cin * 16); i += 1
    p["enc_fc_w"] = u(ks[i], (128 * 16 * 16, 1024), 128 * 16 * 16); i += 1
    p["enc_fc_b"] = u(ks[i], (1024,), 128 * 16 * 16); i += 1
    p["fc_mu_w"] = u(ks[i], (1024, LATENT_DIM), 1024); i += 1
    p["fc_mu_b"] = u(ks[i], (LATENT_DIM,), 1024); i += 1
    p["fc_lv_w"] = u(ks[i], (1024, LATENT_DIM), 1024); i += 1
    p["fc_lv_b"] = u(ks[i], (LATENT_DIM,), 1024); i += 1
    p["dec_in_w"] = u(ks[i], (LATENT_DIM, 1024), LATENT_DIM); i += 1
    p["dec_in_b"] = u(ks[i], (1024,), LATENT_DIM); i += 1
    p["dec_fc_w"] = u(ks[i], (1024, 128 * 16 * 16), 1024); i += 1
    p["dec_fc_b"] = u(ks[i], (128 * 16 * 16,), 1024); i += 1
    for n, (cin, cout) in enumerate([(128, 64), (64, 32), (32, 16), (16, 3)], 1):
        p[f"dec_w{n}"] = u(ks[i], (cin, cout, 4, 4), cin * 16); i += 1
        p[f"dec_b{n}"] = u(ks[i], (cout,), cin * 16); i += 1
    return p


def prepare_params(p):
    """One-time conversion to kernel-ready tensors: matmul layouts, 128-lane
    padding, bf16 storage, int8 FC quantization, and the NCHW Flatten /
    Unflatten permutations folded into the FC weights."""
    q = {}
    for n in range(1, 5):
        q[f"enc_w{n}"] = _conv_wmat(p[f"enc_w{n}"])
        q[f"enc_b{n}"] = _pad_axis(p[f"enc_b{n}"].astype(jnp.float32), 0, 128)
    # encoder FC: permute rows from NCHW-flatten to NHWC-flatten order, then int8.
    w = p["enc_fc_w"].astype(jnp.float32)
    w = w.reshape(128, 16, 16, 1024).transpose(1, 2, 0, 3).reshape(128 * 16 * 16, 1024)
    q["enc_fc_w"], q["enc_fc_s"] = _quantize_int8(w)
    q["enc_fc_b"] = p["enc_fc_b"].astype(jnp.float32)
    # fused [mu | log_var] head
    q["mulv_w"] = jnp.concatenate([p["fc_mu_w"], p["fc_lv_w"]], axis=1).astype(jnp.bfloat16)
    q["mulv_b"] = jnp.concatenate([p["fc_mu_b"], p["fc_lv_b"]], axis=0).astype(jnp.float32)
    q["dec_in_w"] = p["dec_in_w"].astype(jnp.bfloat16)
    q["dec_in_b"] = p["dec_in_b"].astype(jnp.float32)
    # decoder FC: permute cols so the output is already NHWC-flattened, then int8.
    w = p["dec_fc_w"].astype(jnp.float32)
    w = w.reshape(1024, 128, 16, 16).transpose(0, 2, 3, 1).reshape(1024, 128 * 16 * 16)
    q["dec_fc_w"], q["dec_fc_s"] = _quantize_int8(w)
    q["dec_fc_b"] = (p["dec_fc_b"].astype(jnp.float32)
                     .reshape(128, 16, 16).transpose(1, 2, 0).reshape(-1))
    for n in range(1, 5):
        q[f"dec_w{n}"] = _deconv_wmat(p[f"dec_w{n}"])
        q[f"dec_b{n}"] = p[f"dec_b{n}"].astype(jnp.float32)
    return q


# --------------------------------------------------------------------------
# VAE forward (matches PyTorch forward: returns (recon, mu, log_var))
# --------------------------------------------------------------------------
def vae_forward(params, x_nchw, eps):
    p = params
    x = jnp.transpose(x_nchw, (0, 2, 3, 1))  # NCHW -> NHWC
    B = x.shape[0]

    # encoder
    h = conv2d_s2k4p1(x, p["enc_w1"], p["enc_b1"], 16, "relu")
    h = conv2d_s2k4p1(h, p["enc_w2"], p["enc_b2"], 32, "relu")
    h = conv2d_s2k4p1(h, p["enc_w3"], p["enc_b3"], 64, "relu")
    h = conv2d_s2k4p1(h, p["enc_w4"], p["enc_b4"], 128, "relu")
    # enc_fc rows were pre-permuted to consume the NHWC flatten directly.
    h = matmul_bias_act(h.reshape(B, -1), p["enc_fc_w"], p["enc_fc_b"], "relu",
                        out_dtype=jnp.bfloat16, w_scale=p["enc_fc_s"])

    # fused mu / log_var head + reparameterization (eps = torch.randn_like equiv.)
    mu, log_var, z = mulv_reparameterize(h, p["mulv_w"], p["mulv_b"], eps)

    # decoder
    d = matmul_bias_act(z, p["dec_in_w"], p["dec_in_b"], "none",
                        out_dtype=jnp.bfloat16)
    d = matmul_bias_act(d, p["dec_fc_w"], p["dec_fc_b"], "relu",
                        out_dtype=jnp.bfloat16, w_scale=p["dec_fc_s"])
    d = d.reshape(B, 16, 16, 128)  # dec_fc cols pre-permuted to NHWC order
    d = conv_transpose2d_s2k4p1(d, p["dec_w1"], p["dec_b1"], "relu")
    d = conv_transpose2d_s2k4p1(d, p["dec_w2"], p["dec_b2"], "relu")
    d = conv_transpose2d_s2k4p1(d, p["dec_w3"], p["dec_b3"], "relu")
    d = conv_transpose2d_s2k4p1(d, p["dec_w4"], p["dec_b4"], "sigmoid",
                                out_dtype=jnp.float32)
    recon = jnp.transpose(d, (0, 3, 1, 2))  # NHWC -> NCHW
    return recon, mu, log_var


# --------------------------------------------------------------------------
# Literal-formula references for Conv2d / ConvTranspose2d (self-checks)
# --------------------------------------------------------------------------
def _conv_ref(x, w, b):
    B, H, W, C = x.shape
    cout = w.shape[0]
    Ho, Wo = H // 2, W // 2
    xp = jnp.pad(x, ((0, 0), (1, 1), (1, 1), (0, 0)))
    out = jnp.zeros((B, Ho, Wo, cout), jnp.float32)
    for ky in range(4):
        for kx in range(4):
            tap = xp[:, ky:ky + 2 * Ho - 1:2, kx:kx + 2 * Wo - 1:2, :]
            out = out + jnp.einsum("bhwc,dc->bhwd", tap, w[:, :, ky, kx])
    return out + b.reshape(1, 1, 1, cout)


def _deconv_ref(x, w, b):
    B, H, W, cin = x.shape
    cout = w.shape[1]
    out = jnp.zeros((B, 2 * H + 2, 2 * W + 2, cout), jnp.float32)
    for ky in range(4):
        for kx in range(4):
            contrib = jnp.einsum("bhwc,cd->bhwd", x, w[:, :, ky, kx])
            out = out.at[:, ky:ky + 2 * H:2, kx:kx + 2 * W:2, :].add(contrib)
    return out[:, 1:1 + 2 * H, 1:1 + 2 * W, :] + b.reshape(1, 1, 1, cout)


def _self_check():
    k = jax.random.split(jax.random.PRNGKey(42), 6)
    # Conv2d(k=4, s=2, p=1)
    x = jax.random.uniform(k[0], (1, 8, 8, 4), jnp.float32, -1, 1)
    w = jax.random.uniform(k[1], (8, 4, 4, 4), jnp.float32, -0.5, 0.5)
    b = jax.random.uniform(k[2], (8,), jnp.float32, -0.5, 0.5)
    got = conv2d_s2k4p1(x, _conv_wmat(w), _pad_axis(b, 0, 128), 8, "none")
    err = float(jnp.max(jnp.abs(got.astype(jnp.float32) - _conv_ref(x, w, b))))
    assert err < 0.2, f"conv mismatch: {err}"
    # ConvTranspose2d(k=4, s=2, p=1)
    x = jax.random.uniform(k[3], (1, 4, 4, 8), jnp.float32, -1, 1)
    w = jax.random.uniform(k[4], (8, 4, 4, 4), jnp.float32, -0.5, 0.5)
    b = jax.random.uniform(k[5], (4,), jnp.float32, -0.5, 0.5)
    got = conv_transpose2d_s2k4p1(x, _deconv_wmat(w), b, "none",
                                  out_dtype=jnp.float32)
    err = float(jnp.max(jnp.abs(got - _deconv_ref(x, w, b))))
    assert err < 0.2, f"conv_transpose mismatch: {err}"


if __name__ == "__main__":
    _self_check()

    key = jax.random.PRNGKey(0)
    pkey, xkey, ekey = jax.random.split(key, 3)
    params = prepare_params(init_params(pkey))

    # Linear(128*16*16, 1024) after 4 stride-2 convs implies a 256x256 RGB input.
    x = jax.random.uniform(xkey, (2, 3, 256, 256), jnp.float32)
    eps = jax.random.normal(ekey, (2, LATENT_DIM), jnp.float32)

    fwd = jax.jit(vae_forward)
    recon, mu, log_var = fwd(params, x, eps)
    jax.block_until_ready((recon, mu, log_var))

    assert recon.shape == (2, 3, 256, 256)
    assert mu.shape == (2, LATENT_DIM) and log_var.shape == (2, LATENT_DIM)
    assert recon.dtype == jnp.float32
    assert bool(jnp.all(recon >= 0.0) & jnp.all(recon <= 1.0))
    print("KERNEL_OK")
</pallas_src>

<mosaic_0001>
module attributes {stable_mosaic.version = 11 : i64} {
  func.func @_mm_kernel_single_k(%arg0: i32, %arg1: i32, %arg2: memref<16x64xbf16, #tpu.memory_space<vmem>>, %arg3: memref<64x128xbf16, #tpu.memory_space<vmem>>, %arg4: memref<1x128xf32, #tpu.memory_space<vmem>>, %arg5: memref<1x128xf32, #tpu.memory_space<vmem>>, %arg6: memref<16x128xbf16, #tpu.memory_space<vmem>>) attributes {dimension_semantics = [#tpu.dimension_semantics<parallel>, #tpu.dimension_semantics<parallel>], iteration_bounds = array<i64: 1, 1>, scalar_prefetch = 0 : i64, scratch_operands = 0 : i64, tpu.core_type = #tpu.core_type<tc>, window_params = [{transform_indices = @transform_0, window_bounds = array<i64: 16, 64>}, {transform_indices = @transform_1, window_bounds = array<i64: 64, 128>}, {transform_indices = @transform_2, window_bounds = array<i64: 1, 128>}, {transform_indices = @transform_3, window_bounds = array<i64: 1, 128>}, {transform_indices = @transform_4, window_bounds = array<i64: 16, 128>}]} {
    %c0 = arith.constant 0 : index
    %c0_0 = arith.constant 0 : index
    %0 = vector.load %arg2[%c0, %c0_0] : memref<16x64xbf16, #tpu.memory_space<vmem>>, vector<16x64xbf16>
    %c0_1 = arith.constant 0 : index
    %c0_2 = arith.constant 0 : index
    %1 = vector.load %arg3[%c0_1, %c0_2] : memref<64x128xbf16, #tpu.memory_space<vmem>>, vector<64x128xbf16>
    %cst = arith.constant dense<0.000000e+00> : vector<16x128xf32>
    %2 = tpu.matmul %0, %1, %cst {dimension_numbers = #tpu.dot_dimension_numbers<[1], [0], [0], [1], [0, 0, 1, 1], [], []>} : vector<16x64xbf16>, vector<64x128xbf16>, vector<16x128xf32> -> vector<16x128xf32>
    %c0_3 = arith.constant 0 : index
    %c0_4 = arith.constant 0 : index
    %3 = vector.load %arg4[%c0_3, %c0_4] : memref<1x128xf32, #tpu.memory_space<vmem>>, vector<1x128xf32>
    %4 = vector.broadcast %3 : vector<1x128xf32> to vector<16x128xf32>
    %5 = arith.mulf %2, %4 : vector<16x128xf32>
    %c0_5 = arith.constant 0 : index
    %c0_6 = arith.constant 0 : index
    %6 = vector.load %arg5[%c0_5, %c0_6] : memref<1x128xf32, #tpu.memory_space<vmem>>, vector<1x128xf32>
    %7 = vector.broadcast %6 : vector<1x128xf32> to vector<16x128xf32>
    %8 = arith.addf %5, %7 : vector<16x128xf32>
    %9 = arith.truncf %8 : vector<16x128xf32> to vector<16x128xbf16>
    %c0_7 = arith.constant 0 : index
    %c0_8 = arith.constant 0 : index
    %10 = vector.load %arg6[%c0_7, %c0_8] : memref<16x128xbf16, #tpu.memory_space<vmem>>, vector<16x128xbf16>
    tpu.vector_store %arg6[%c0_7, %c0_8], %9 {strides = array<i32>} : memref<16x128xbf16, #tpu.memory_space<vmem>>, vector<16x128xbf16>,
    return
  }
  func.func @transform_0(%arg0: i32, %arg1: i32) -> (i32, i32) {
    %c0_i32 = arith.constant 0 : i32
    %c0_i32_0 = arith.constant 0 : i32
    return %arg0, %c0_i32 : i32, i32
  }
  func.func @transform_1(%arg0: i32, %arg1: i32) -> (i32, i32) {
    %c0_i32 = arith.constant 0 : i32
    %c0_i32_0 = arith.constant 0 : i32
    return %c0_i32, %arg1 : i32, i32
  }
  func.func @transform_2(%arg0: i32, %arg1: i32) -> (i32, i32) {
    %c0_i32 = arith.constant 0 : i32
    %c0_i32_0 = arith.constant 0 : i32
    return %c0_i32, %arg1 : i32, i32
  }
  func.func @transform_3(%arg0: i32, %arg1: i32) -> (i32, i32) {
    %c0_i32 = arith.constant 0 : i32
    %c0_i32_0 = arith.constant 0 : i32
    return %c0_i32, %arg1 : i32, i32
  }
  func.func @transform_4(%arg0: i32, %arg1: i32) -> (i32, i32) {
    %c0_i32 = arith.constant 0 : i32
    return %arg0, %arg1 : i32, i32
  }
}

</mosaic_0001>

<llo_original>
// kernel: tpu_custom_call.1
$region0: #{tpu_custom_call.1}
  #allocation0 [shape = 'u32[]', space=smem, size = 0x4, offset = 0x4, fixed_abs, tag = 'smem constant byte address 0x4 - core index']
  #allocation1 [shape = 'u32[144,128]{1,0:T(1,128)}', space=vmem, size = 0x12000, scoped, tag = 'internal scratch']
  %s0 = inlined_call_operand.hbm [shape: bf16[16,64], index: 0, kind: input, shape index: {}]
  %s1 = inlined_call_operand.hbm [shape: bf16[64,128], index: 1, kind: input, shape index: {}]
  %s2 = inlined_call_operand.vmem [shape: f32[1,128], index: 2, kind: input, shape index: {}]
  %s3 = inlined_call_operand.vmem [shape: f32[1,128], index: 3, kind: input, shape index: {}]
  %s4 = inlined_call_operand.hbm [shape: bf16[16,128], index: 4, kind: output, shape index: {}]
  %s5 = sld [smem:[#allocation0]]
  $region34: #{tpu_custom_call.1} parent=0
    _
  %s7 = ssub.s32 1, %s5
  %s8 = scalar_select 0, %s7, %s5
  $region1: #{tpu_custom_call.1} parent=0
    #allocation2 [shape = 'u8[4096]{0}', space=vmem, size = 0x1000, scoped, tag = 'input window, operand 0, single buffered']
    #allocation3 [shape = 's32[1]{0}', space=sflag, size = 0x4, scoped, tag = 'scoped memory for tpu_custom_call.1']
    #allocation4 [shape = 's32[1]{0}', space=sflag, size = 0x4, scoped, tag = 'scoped memory for tpu_custom_call.1']
    #allocation5 [shape = 'u8[16384]{0}', space=vmem, size = 0x4000, scoped, tag = 'input window, operand 1, single buffered']
    #allocation6 [shape = 's32[1]{0}', space=sflag, size = 0x4, scoped, tag = 'scoped memory for tpu_custom_call.1']
    #allocation7 [shape = 'u8[4096]{0}', space=vmem, size = 0x1000, scoped, tag = 'output window, operand 0, single buffered']
    %9 = vsyncpa [#allocation3], 0
    %10 = vsyncpa [#allocation6], 0
    %11 = vsyncpa [#allocation4], 0
    // Predicated region
    $region2: #{tpu_custom_call.1} parent=1 // pred_check
      _
    $region3: #{tpu_custom_call.1} parent=1 // pred_check_branch
      %13 = sbr.rel (0) target = $region5
    $region4: #{tpu_custom_call.1} parent=1 // pred_region
      %s15 = ssub.s32 128, 128
      %16 = vsyncadd [#allocation3], %s15
      %s17 = sshll.u32 [#allocation2], 4
      %s18 = int_to_ptr.vmem [resolvable:$true] %s17
      %23 = dma.hbm_to_vmem [thread:$0]  %s0, 128, %s18, [#allocation3], 64, 64, 4
    $region5: #{tpu_custom_call.1} parent=1 // pred_fallthru
      _
    // Predicated region
    $region6: #{tpu_custom_call.1} parent=1 // pred_check
      _
    $region7: #{tpu_custom_call.1} parent=1 // pred_check_branch
      %25 = sbr.rel (0) target = $region9
    $region8: #{tpu_custom_call.1} parent=1 // pred_region
      %s27 = ssub.s32 512, 512
      %28 = vsyncadd [#allocation6], %s27
      %s29 = sshll.u32 [#allocation5], 4
      %s30 = int_to_ptr.vmem [resolvable:$true] %s29
      %35 = dma.hbm_to_vmem [thread:$0]  %s1, 512, %s30, [#allocation6], 64, 64, 4
    $region9: #{tpu_custom_call.1} parent=1 // pred_fallthru
      _
    // Predicated region
    $region10: #{tpu_custom_call.1} parent=1 // pred_check
      _
    $region11: #{tpu_custom_call.1} parent=1 // pred_check_branch
      %37 = sbr.rel (0) target = $region13
    $region12: #{tpu_custom_call.1} parent=1 // pred_region
      _
    $region13: #{tpu_custom_call.1} parent=1 // pred_fallthru
      _
    // Predicated region
    $region14: #{tpu_custom_call.1} parent=1 // pred_check
      _
    $region15: #{tpu_custom_call.1} parent=1 // pred_check_branch
      %39 = sbr.rel (0) target = $region17
    $region16: #{tpu_custom_call.1} parent=1 // pred_region
      _
    $region17: #{tpu_custom_call.1} parent=1 // pred_fallthru
      _
    // Predicated region
    $region18: #{tpu_custom_call.1} parent=1 // pred_check
      _
    $region19: #{tpu_custom_call.1} parent=1 // pred_check_branch
      %41 = sbr.rel (0) target = $region21
    $region20: #{tpu_custom_call.1} parent=1 // pred_region
      %42 = dma.done [#allocation3], 128
    $region21: #{tpu_custom_call.1} parent=1 // pred_fallthru
      _
    // Predicated region
    $region22: #{tpu_custom_call.1} parent=1 // pred_check
      _
    $region23: #{tpu_custom_call.1} parent=1 // pred_check_branch
      %44 = sbr.rel (0) target = $region25
    $region24: #{tpu_custom_call.1} parent=1 // pred_region
      %45 = dma.done [#allocation6], 512
    $region25: #{tpu_custom_call.1} parent=1 // pred_fallthru
      _
    %v47 = vld [vmem:[#allocation2] sm:$0xf]
    %v48 = vld [vmem:[#allocation2 + $0x4] sm:$0xf]
    %v49 = vld [vmem:[#allocation5] sm:$0xf]
    %v50 = vld [vmem:[#allocation5 + $0x4] sm:$0xf]
    %v51 = vld [vmem:[#allocation5 + $0x8] sm:$0xf]
    %v52 = vld [vmem:[#allocation5 + $0xc] sm:$0xf]
    %v53 = vld [vmem:[#allocation5 + $0x10] sm:$0xf]
    %v54 = vld [vmem:[#allocation5 + $0x14] sm:$0xf]
    %v55 = vld [vmem:[#allocation5 + $0x18] sm:$0xf]
    %v56 = vld [vmem:[#allocation5 + $0x1c] sm:$0xf]
    %v59 = vunpack.c.l.b16 %v47
    %v60 = vunpack.c.l.b16 %v48
    %v61 = vpack.c.b16 %v60, %v59
    %v70 = vunpack.c.l.b16 %v49
    %v71 = vunpack.c.l.b16 %v50
    %v72 = vunpack.c.l.b16 %v51
    %v73 = vunpack.c.l.b16 %v52
    %v74 = vunpack.c.l.b16 %v53
    %v75 = vunpack.c.l.b16 %v54
    %v76 = vunpack.c.l.b16 %v55
    %v77 = vunpack.c.l.b16 %v56
    %v78 = vpack.c.b16 %v71, %v70
    %v79 = vpack.c.b16 %v73, %v72
    %v80 = vpack.c.b16 %v75, %v74
    %v81 = vpack.c.b16 %v77, %v76
    %vm86 = vcmask 523264
    %v88 = vsel %vm86, %v61, 0
    %90 = vmatprep.subr.bf16.mxu0 0
    %91 = vmatpush1.bf16.msra.mxu0 %v78
    %92 = vmatprep.subr.bf16.mxu0 0
    %93 = vmatpush1.bf16.msra.mxu0 %v79
    %94 = vmatprep.subr.bf16.mxu0 0
    %95 = vmatpush1.bf16.msra.mxu0 %v80
    %96 = vmatprep.subr.bf16.mxu0 0
    %97 = vmatpush1.bf16.msra.mxu0 %v81
    %98 = vmatprep.subr.bf16.mxu0 0
    %99 = vmatpush1.bf16.msra.mxu0 0
    %100 = vmatprep.subr.bf16.mxu0 0
    %101 = vmatpush1.bf16.msra.mxu0 0
    %102 = vmatprep.subr.bf16.mxu0 0
    %103 = vmatpush1.bf16.msra.mxu0 0
    %104 = vmatprep.subr.bf16.mxu0 0
    %105 = vmatpush1.bf16.msra.mxu0 0
    %106 = vmatprep.subr.bf16.mxu0 0
    %107 = vmatpush1.bf16.msra.mxu0 0
    %108 = vmatprep.subr.bf16.mxu0 0
    %109 = vmatpush1.bf16.msra.mxu0 0
    %110 = vmatprep.subr.bf16.mxu0 0
    %111 = vmatpush1.bf16.msra.mxu0 0
    %112 = vmatprep.subr.bf16.mxu0 0
    %113 = vmatpush1.bf16.msra.mxu0 0
    %114 = vmatprep.subr.bf16.mxu0 0
    %115 = vmatpush1.bf16.msra.mxu0 0
    %116 = vmatprep.subr.bf16.mxu0 0
    %117 = vmatpush1.bf16.msra.mxu0 0
    %118 = vmatprep.subr.bf16.mxu0 0
    %119 = vmatpush1.bf16.msra.mxu0 0
    %120 = vmatprep.subr.bf16.mxu0 0
    %121 = vmatpush1.bf16.msra.mxu0 0
    %122 = vmatprep.mubr.bf16.mxu0 0
    %123 = vmatmul.mubr.bf16.gmra.mrb[0].mxu0 %v88
    %v124 = vpop.f32.mrb[0].mxu0
    %v125 = vadd.f32 0.0, %v124
    %v126 = vpop.f32.mrb[0].mxu0
    %v127 = vpop.f32.mrb[0].mxu0
    %v128 = vadd.f32 0.0, %v127
    %v129 = vpop.f32.mrb[0].mxu0
    %130 = vdwg.mxu0
    %v131 = vld [vmem:[%s2] sm:$0x1]
    %v133 = vlaneseq
    %v134 = vshrl.u32 %v133, 7
    %v135 = vsub.s32 0, %v134
    %v136 = vrot.slane %v131, %v135
    %v138 = vmul.f32 %v125, %v136
    %v139 = vmul.f32 %v128, %v136
    %v140 = vld [vmem:[%s3] sm:$0x1]
    %v142 = vlaneseq
    %v143 = vshrl.u32 %v142, 7
    %v144 = vsub.s32 0, %v143
    %v145 = vrot.slane %v140, %v144
    %v147 = vadd.f32 %v138, %v145
    %v148 = vadd.f32 %v139, %v145
    %v149 = vpack.c.bf16 %v148, %v147
    %v151 = vunpack.c.l.b16 %v149
    %v152 = vunpack.c.h.b16 %v149
    %v153 = vpack.c.b16 %v151, %v151
    %v154 = vpack.c.b16 %v152, %v152
    %157 = vst [vmem:[#allocation7] sm:$0xf] %v153
    %158 = vst [vmem:[#allocation7 + $0x4] sm:$0xf] %v154
    // Predicated region
    $region26: #{tpu_custom_call.1} parent=1 // pred_check
      _
    $region27: #{tpu_custom_call.1} parent=1 // pred_check_branch
      %160 = sbr.rel (0) target = $region29
    $region28: #{tpu_custom_call.1} parent=1 // pred_region
      %s162 = ssub.s32 128, 128
      %163 = vsyncadd [#allocation4], %s162
      %s164 = sshll.u32 [#allocation7], 4
      %s165 = int_to_ptr.vmem [resolvable:$true] %s164
      %170 = dma.vmem_to_hbm [thread:$0]  %s165, 128, %s4, [#allocation4], 64, 64, 4
    $region29: #{tpu_custom_call.1} parent=1 // pred_fallthru
      _
    // Predicated region
    $region30: #{tpu_custom_call.1} parent=1 // pred_check
      _
    $region31: #{tpu_custom_call.1} parent=1 // pred_check_branch
      %172 = sbr.rel (0) target = $region33
    $region32: #{tpu_custom_call.1} parent=1 // pred_region
      %173 = dma.done [#allocation4], 128
    $region33: #{tpu_custom_call.1} parent=1 // pred_fallthru
      _
    %174 = vsyncpa [#allocation3], 1
    %175 = vsyncpa [#allocation6], 1
    %176 = vsyncpa [#allocation4], 1

</llo_original>
